<compile_context>
chip_gen: v5e
topology: v5e:2x2
jax: 0.10.0
libtpu: 0.0.40
codegen_flags: <defaults>
</compile_context>

<pallas_src>
import functools

import jax
import jax.numpy as jnp
from jax.experimental import pallas as pl
from jax.experimental.pallas import tpu as pltpu


def _round_up(n, m):
    return ((n + m - 1) // m) * m


def _mlp_kernel(x_ref, w1b1_ref, w2b2_ref, o_ref, *,
                d_in, bias1_start, hidden_p, b_rows):
    # Static, sublane-aligned views of the packed parameter buffers.
    w1 = w1b1_ref[:d_in, :]                              # (D,  Hp)
    b1 = w1b1_ref[bias1_start:bias1_start + b_rows, :]   # (Bp, Hp) pre-broadcast
    w2 = w2b2_ref[:hidden_p, :]                          # (Hp, Cp)
    b2 = w2b2_ref[hidden_p:hidden_p + b_rows, :]         # (Bp, Cp) pre-broadcast

    # fc1 + bias + ReLU: one MXU matmul, pure VPU epilogue (no broadcasts).
    h = jnp.dot(x_ref[...], w1, preferred_element_type=jnp.float32) + b1
    h = jnp.maximum(h, 0.0)

    # fc2 + bias: lane-dense (Bp, Cp) output -> unmasked vector stores.
    o = jnp.dot(h, w2, preferred_element_type=jnp.float32) + b2
    o_ref[...] = o.astype(o_ref.dtype)


def pack_params(w1, b1, w2, b2, batch):
    """Build packed, lane-padded parameter buffers ONCE (cache the result).

    w1: (D, H), b1: (1, H) or (H,); w2: (H, C), b2: (1, C) or (C,).
    Weights are stored (in_features, out_features), i.e. the transpose of
    PyTorch's nn.Linear.weight, so the kernel computes x @ W + b directly.
    Biases are pre-broadcast to Bp = round_up(batch, 8) sublane rows.
    """
    D, H = w1.shape
    C = w2.shape[1]
    LANE, SUB = 128, 8
    Hp = _round_up(H, LANE)        # 100 -> 128
    Cp = _round_up(C, LANE)        # 10  -> 128
    Bp = _round_up(batch, SUB)     # 8   -> 8
    bias1_start = _round_up(D, SUB)

    dtype = w1.dtype
    w1b1 = (
        jnp.zeros((bias1_start + Bp, Hp), dtype)
        .at[:D, :H].set(w1)
        .at[bias1_start:bias1_start + Bp, :H]
        .set(jnp.broadcast_to(jnp.reshape(b1, (1, H)), (Bp, H)))
    )
    w2b2 = (
        jnp.zeros((Hp + Bp, Cp), dtype)
        .at[:H, :C].set(w2)
        .at[Hp:Hp + Bp, :C]
        .set(jnp.broadcast_to(jnp.reshape(b2, (1, C)), (Bp, C)))
    )

    meta = dict(d_in=D, bias1_start=bias1_start, hidden_p=Hp,
                b_rows=Bp, num_classes=C)
    return w1b1, w2b2, meta


@functools.partial(
    jax.jit,
    static_argnames=("d_in", "bias1_start", "hidden_p", "b_rows", "num_classes"))
def simplenet_forward(x, w1b1, w2b2, *, d_in, bias1_start, hidden_p,
                      b_rows, num_classes):
    """x: (B, D) with round_up(B, 8) == b_rows used at pack time."""
    B = x.shape[0]
    Bp = b_rows
    Hp = hidden_p
    Cp = w2b2.shape[1]

    # Pad batch rows up to the sublane tile the packed biases were built for
    # (no-op for B == Bp, fused into the jit otherwise).
    if Bp != B:
        x = jnp.pad(x, ((0, Bp - B), (0, 0)))

    flops = 2 * Bp * (d_in * Hp + Hp * Cp)
    bytes_accessed = 4 * (Bp * d_in + w1b1.size + w2b2.size + Bp * Cp)

    kernel = functools.partial(_mlp_kernel, d_in=d_in, bias1_start=bias1_start,
                               hidden_p=Hp, b_rows=Bp)

    out_padded = pl.pallas_call(
        kernel,
        out_shape=jax.ShapeDtypeStruct((Bp, Cp), x.dtype),
        # No grid: single invocation, everything VMEM-resident.
        in_specs=[
            pl.BlockSpec(memory_space=pltpu.MemorySpace.VMEM),  # x
            pl.BlockSpec(memory_space=pltpu.MemorySpace.VMEM),  # [w1; b1_bcast]
            pl.BlockSpec(memory_space=pltpu.MemorySpace.VMEM),  # [w2; b2_bcast]
        ],
        out_specs=pl.BlockSpec(memory_space=pltpu.MemorySpace.VMEM),
        cost_estimate=pl.CostEstimate(flops=flops, transcendentals=0,
                                      bytes_accessed=bytes_accessed),
    )(x, w1b1, w2b2)

    # Slice back to the real (B, num_classes) inside the same jit (fused, no
    # separate XLA dispatch or extra HBM round-trip).
    return out_padded[:B, :num_classes]


if __name__ == "__main__":
    # Small shapes consistent with the module: x is (batch, input_size).
    batch = 8
    input_size = 32
    hidden = 100          # fixed by SimpleNet.__init__ (nn.Linear(input_size, 100))
    num_classes = 10

    key = jax.random.PRNGKey(0)
    kx, kw1, kb1, kw2, kb2 = jax.random.split(key, 5)

    x = jax.random.normal(kx, (batch, input_size), dtype=jnp.float32)

    # Deterministic parameter init (PyTorch-style uniform(-1/sqrt(fan_in), +)).
    bound1 = 1.0 / jnp.sqrt(jnp.float32(input_size))
    w1 = jax.random.uniform(kw1, (input_size, hidden), jnp.float32,
                            -bound1, bound1)
    b1 = jax.random.uniform(kb1, (1, hidden), jnp.float32, -bound1, bound1)

    bound2 = 1.0 / jnp.sqrt(jnp.float32(hidden))
    w2 = jax.random.uniform(kw2, (hidden, num_classes), jnp.float32,
                            -bound2, bound2)
    b2 = jax.random.uniform(kb2, (1, num_classes), jnp.float32,
                            -bound2, bound2)

    # One-time parameter packing (in a real deployment this is cached with the
    # model weights; it is NOT on the per-call path).
    w1b1, w2b2, meta = pack_params(w1, b1, w2, b2, batch)
    w1b1, w2b2 = jax.block_until_ready((w1b1, w2b2))

    out = simplenet_forward(x, w1b1, w2b2, **meta)
    out = jax.block_until_ready(out)

    # Pure-JAX reference check (f32 end to end, so tight tolerance holds).
    ref = jnp.maximum(x @ w1 + b1, 0.0) @ w2 + b2
    assert out.shape == (batch, num_classes)
    assert jnp.allclose(out, ref, atol=1e-5, rtol=1e-5)

    print("KERNEL_OK")
</pallas_src>

<mosaic_0001>
module attributes {stable_mosaic.version = 11 : i64} {
  func.func @_mlp_kernel(%arg0: memref<8x32xf32, #tpu.memory_space<vmem>>, %arg1: memref<40x128xf32, #tpu.memory_space<vmem>>, %arg2: memref<136x128xf32, #tpu.memory_space<vmem>>, %arg3: memref<8x128xf32, #tpu.memory_space<vmem>>) attributes {dimension_semantics = [], scalar_prefetch = 0 : i64, scratch_operands = 0 : i64, tpu.core_type = #tpu.core_type<tc>} {
    %c0 = arith.constant 0 : index
    %c0_0 = arith.constant 0 : index
    %0 = vector.load %arg1[%c0, %c0_0] : memref<40x128xf32, #tpu.memory_space<vmem>>, vector<32x128xf32>
    %c32 = arith.constant 32 : index
    %c0_1 = arith.constant 0 : index
    %1 = vector.load %arg1[%c32, %c0_1] : memref<40x128xf32, #tpu.memory_space<vmem>>, vector<8x128xf32>
    %c0_2 = arith.constant 0 : index
    %c0_3 = arith.constant 0 : index
    %2 = vector.load %arg2[%c0_2, %c0_3] : memref<136x128xf32, #tpu.memory_space<vmem>>, vector<128x128xf32>
    %c128 = arith.constant 128 : index
    %c0_4 = arith.constant 0 : index
    %3 = vector.load %arg2[%c128, %c0_4] : memref<136x128xf32, #tpu.memory_space<vmem>>, vector<8x128xf32>
    %c0_5 = arith.constant 0 : index
    %c0_6 = arith.constant 0 : index
    %4 = vector.load %arg0[%c0_5, %c0_6] : memref<8x32xf32, #tpu.memory_space<vmem>>, vector<8x32xf32>
    %cst = arith.constant dense<0.000000e+00> : vector<8x128xf32>
    %5 = tpu.matmul %4, %0, %cst {dimension_numbers = #tpu.dot_dimension_numbers<[1], [0], [0], [1], [0, 0, 1, 1], [], []>} : vector<8x32xf32>, vector<32x128xf32>, vector<8x128xf32> -> vector<8x128xf32>
    %6 = arith.addf %5, %1 : vector<8x128xf32>
    %cst_7 = arith.constant 0.000000e+00 : f32
    %7 = vector.broadcast %cst_7 : f32 to vector<8x128xf32>
    %8 = arith.maximumf %6, %7 : vector<8x128xf32>
    %cst_8 = arith.constant dense<0.000000e+00> : vector<8x128xf32>
    %9 = tpu.matmul %8, %2, %cst_8 {dimension_numbers = #tpu.dot_dimension_numbers<[1], [0], [0], [1], [0, 0, 1, 1], [], []>} : vector<8x128xf32>, vector<128x128xf32>, vector<8x128xf32> -> vector<8x128xf32>
    %10 = arith.addf %9, %3 : vector<8x128xf32>
    %c0_9 = arith.constant 0 : index
    %c0_10 = arith.constant 0 : index
    %11 = vector.load %arg3[%c0_9, %c0_10] : memref<8x128xf32, #tpu.memory_space<vmem>>, vector<8x128xf32>
    tpu.vector_store %arg3[%c0_9, %c0_10], %10 {strides = array<i32>} : memref<8x128xf32, #tpu.memory_space<vmem>>, vector<8x128xf32>,
    return
  }
}

</mosaic_0001>

<llo_original>
// kernel: simplenet_forward.1
$region0: #{simplenet_forward.1}
  #allocation0 [shape = 'u32[]', space=smem, size = 0x4, offset = 0x4, fixed_abs, tag = 'smem constant byte address 0x4 - core index']
  #allocation1 [shape = 'u32[72,128]{1,0:T(1,128)}', space=vmem, size = 0x9000, scoped, tag = 'internal scratch']
  %s0 = inlined_call_operand.hbm [shape: f32[8,32], index: 0, kind: input, shape index: {}]
  %s1 = inlined_call_operand.hbm [shape: f32[40,128], index: 1, kind: input, shape index: {}]
  %s2 = inlined_call_operand.hbm [shape: f32[136,128], index: 2, kind: input, shape index: {}]
  %s3 = inlined_call_operand.hbm [shape: f32[8,128], index: 3, kind: output, shape index: {}]
  %s4 = sld [smem:[#allocation0]]
  $region34: #{simplenet_forward.1} parent=0
    _
  %s6 = ssub.s32 1, %s4
  %s7 = scalar_select 0, %s6, %s4
  $region1: #{simplenet_forward.1} parent=0
    #allocation2 [shape = 'u8[4096]{0}', space=vmem, size = 0x1000, scoped, tag = 'input window, operand 0, single buffered']
    #allocation3 [shape = 's32[1]{0}', space=sflag, size = 0x4, scoped, tag = 'scoped memory for simplenet_forward.1']
    #allocation4 [shape = 's32[1]{0}', space=sflag, size = 0x4, scoped, tag = 'scoped memory for simplenet_forward.1']
    #allocation5 [shape = 'u8[20480]{0}', space=vmem, size = 0x5000, scoped, tag = 'input window, operand 1, single buffered']
    #allocation6 [shape = 's32[1]{0}', space=sflag, size = 0x4, scoped, tag = 'scoped memory for simplenet_forward.1']
    #allocation7 [shape = 'u8[69632]{0}', space=vmem, size = 0x11000, scoped, tag = 'input window, operand 2, single buffered']
    #allocation8 [shape = 'u8[4096]{0}', space=vmem, size = 0x1000, scoped, tag = 'output window, operand 0, single buffered']
    %8 = vsyncpa [#allocation3], 0
    %9 = vsyncpa [#allocation6], 0
    %10 = vsyncpa [#allocation4], 0
    // Predicated region
    $region2: #{simplenet_forward.1} parent=1 // pred_check
      _
    $region3: #{simplenet_forward.1} parent=1 // pred_check_branch
      %12 = sbr.rel (0) target = $region5
    $region4: #{simplenet_forward.1} parent=1 // pred_region
      %14 = vsyncadd [#allocation3], 0
      %s16 = sshll.u32 %s0, 4
      %s17 = int_to_ptr.hbm [resolvable:$true] %s16
      %s18 = sshll.u32 [#allocation2], 4
      %s19 = int_to_ptr.vmem [resolvable:$true] %s18
      %21 = dma.hbm_to_vmem [thread:$0]  %s17, 128, %s19, [#allocation3]
    $region5: #{simplenet_forward.1} parent=1 // pred_fallthru
      _
    // Predicated region
    $region6: #{simplenet_forward.1} parent=1 // pred_check
      _
    $region7: #{simplenet_forward.1} parent=1 // pred_check_branch
      %23 = sbr.rel (0) target = $region9
    $region8: #{simplenet_forward.1} parent=1 // pred_region
      %25 = vsyncadd [#allocation6], 0
      %s26 = sshll.u32 %s1, 4
      %s27 = int_to_ptr.hbm [resolvable:$true] %s26
      %s28 = sshll.u32 [#allocation5], 4
      %s29 = int_to_ptr.vmem [resolvable:$true] %s28
      %34 = dma.hbm_to_vmem [thread:$0]  %s27, 640, %s29, [#allocation6], 128, 128, 8
    $region9: #{simplenet_forward.1} parent=1 // pred_fallthru
      _
    // Predicated region
    $region10: #{simplenet_forward.1} parent=1 // pred_check
      _
    $region11: #{simplenet_forward.1} parent=1 // pred_check_branch
      %36 = sbr.rel (0) target = $region13
    $region12: #{simplenet_forward.1} parent=1 // pred_region
      %38 = vsyncadd [#allocation6], 0
      %s39 = sshll.u32 %s2, 4
      %s40 = int_to_ptr.hbm [resolvable:$true] %s39
      %s41 = sshll.u32 [#allocation7], 4
      %s42 = int_to_ptr.vmem [resolvable:$true] %s41
      %47 = dma.hbm_to_vmem [thread:$0]  %s40, 2176, %s42, [#allocation6], 128, 128, 8
    $region13: #{simplenet_forward.1} parent=1 // pred_fallthru
      _
    // Predicated region
    $region14: #{simplenet_forward.1} parent=1 // pred_check
      _
    $region15: #{simplenet_forward.1} parent=1 // pred_check_branch
      %49 = sbr.rel (0) target = $region17
    $region16: #{simplenet_forward.1} parent=1 // pred_region
      %51 = dma.done [#allocation3], 128
    $region17: #{simplenet_forward.1} parent=1 // pred_fallthru
      _
    // Predicated region
    $region18: #{simplenet_forward.1} parent=1 // pred_check
      _
    $region19: #{simplenet_forward.1} parent=1 // pred_check_branch
      %53 = sbr.rel (0) target = $region21
    $region20: #{simplenet_forward.1} parent=1 // pred_region
      %55 = dma.done [#allocation6], 640
    $region21: #{simplenet_forward.1} parent=1 // pred_fallthru
      _
    // Predicated region
    $region22: #{simplenet_forward.1} parent=1 // pred_check
      _
    $region23: #{simplenet_forward.1} parent=1 // pred_check_branch
      %57 = sbr.rel (0) target = $region25
    $region24: #{simplenet_forward.1} parent=1 // pred_region
      %59 = dma.done [#allocation6], 2176
    $region25: #{simplenet_forward.1} parent=1 // pred_fallthru
      _
    %v60 = vld [vmem:[#allocation5] sm:$0xff]
    %v61 = vld [vmem:[#allocation5 + $0x8] sm:$0xff]
    %v62 = vld [vmem:[#allocation5 + $0x10] sm:$0xff]
    %v63 = vld [vmem:[#allocation5 + $0x18] sm:$0xff]
    %v64 = vld [vmem:[#allocation5 + $0x20] sm:$0xff]
    %v65 = vld [vmem:[#allocation7] sm:$0xff]
    %v66 = vld [vmem:[#allocation7 + $0x8] sm:$0xff]
    %v67 = vld [vmem:[#allocation7 + $0x10] sm:$0xff]
    %v68 = vld [vmem:[#allocation7 + $0x18] sm:$0xff]
    %v69 = vld [vmem:[#allocation7 + $0x20] sm:$0xff]
    %v70 = vld [vmem:[#allocation7 + $0x28] sm:$0xff]
    %v71 = vld [vmem:[#allocation7 + $0x30] sm:$0xff]
    %v72 = vld [vmem:[#allocation7 + $0x38] sm:$0xff]
    %v73 = vld [vmem:[#allocation7 + $0x40] sm:$0xff]
    %v74 = vld [vmem:[#allocation7 + $0x48] sm:$0xff]
    %v75 = vld [vmem:[#allocation7 + $0x50] sm:$0xff]
    %v76 = vld [vmem:[#allocation7 + $0x58] sm:$0xff]
    %v77 = vld [vmem:[#allocation7 + $0x60] sm:$0xff]
    %v78 = vld [vmem:[#allocation7 + $0x68] sm:$0xff]
    %v79 = vld [vmem:[#allocation7 + $0x70] sm:$0xff]
    %v80 = vld [vmem:[#allocation7 + $0x78] sm:$0xff]
    %v81 = vld [vmem:[#allocation7 + $0x80] sm:$0xff]
    %v82 = vld [vmem:[#allocation2] sm:$0xff]
    %vm83 = vcmask 261120
    %v85 = vsel %vm83, %v82, 0
    %87 = vmatpush.msra.mxu0 0.0
    %88 = vmatpush.msra.mxu0 0.0
    %89 = vmatpush.msra.mxu0 0.0
    %90 = vmatpush.msra.mxu0 0.0
    %91 = vmatpush.msra.mxu0 0.0
    %92 = vmatpush.msra.mxu0 0.0
    %93 = vmatpush.msra.mxu0 0.0
    %94 = vmatpush.msra.mxu0 0.0
    %95 = vmatpush.msra.mxu0 0.0
    %96 = vmatpush.msra.mxu0 0.0
    %97 = vmatpush.msra.mxu0 0.0
    %98 = vmatpush.msra.mxu0 0.0
    %99 = vmatpush.msra.mxu0 %v63
    %100 = vmatpush.msra.mxu0 %v62
    %101 = vmatpush.msra.mxu0 %v61
    %102 = vmatpush.msra.mxu0 %v60
    %103 = vmatmul.f32.gmra.mxu0 %v85
    %v104 = vpop.f32.mrf.mxu0
    %v105 = vadd.f32 %v64, %v104
    %106 = vdwg.mxu0
    %v107 = vmax.f32 %v105, 0.0
    %108 = vmatpush.msra.mxu0 %v80
    %109 = vmatpush.msra.mxu0 %v79
    %110 = vmatpush.msra.mxu0 %v78
    %111 = vmatpush.msra.mxu0 %v77
    %112 = vmatpush.msra.mxu0 %v76
    %113 = vmatpush.msra.mxu0 %v75
    %114 = vmatpush.msra.mxu0 %v74
    %115 = vmatpush.msra.mxu0 %v73
    %116 = vmatpush.msra.mxu0 %v72
    %117 = vmatpush.msra.mxu0 %v71
    %118 = vmatpush.msra.mxu0 %v70
    %119 = vmatpush.msra.mxu0 %v69
    %120 = vmatpush.msra.mxu0 %v68
    %121 = vmatpush.msra.mxu0 %v67
    %122 = vmatpush.msra.mxu0 %v66
    %123 = vmatpush.msra.mxu0 %v65
    %124 = vmatmul.f32.gmra.mxu0 %v107
    %v125 = vpop.f32.mrf.mxu0
    %v126 = vadd.f32 %v81, %v125
    %127 = vdwg.mxu0
    %128 = vst [vmem:[#allocation8] sm:$0xff] %v126
    // Predicated region
    $region26: #{simplenet_forward.1} parent=1 // pred_check
      _
    $region27: #{simplenet_forward.1} parent=1 // pred_check_branch
      %130 = sbr.rel (0) target = $region29
    $region28: #{simplenet_forward.1} parent=1 // pred_region
      %132 = vsyncadd [#allocation4], 0
      %s134 = sshll.u32 [#allocation8], 4
      %s135 = int_to_ptr.vmem [resolvable:$true] %s134
      %s136 = sshll.u32 %s3, 4
      %s137 = int_to_ptr.hbm [resolvable:$true] %s136
      %139 = dma.vmem_to_hbm [thread:$0]  %s135, 128, %s137, [#allocation4]
    $region29: #{simplenet_forward.1} parent=1 // pred_fallthru
      _
    // Predicated region
    $region30: #{simplenet_forward.1} parent=1 // pred_check
      _
    $region31: #{simplenet_forward.1} parent=1 // pred_check_branch
      %141 = sbr.rel (0) target = $region33
    $region32: #{simplenet_forward.1} parent=1 // pred_region
      %143 = dma.done [#allocation4], 128
    $region33: #{simplenet_forward.1} parent=1 // pred_fallthru
      _
    %144 = vsyncpa [#allocation3], 1
    %145 = vsyncpa [#allocation6], 1
    %146 = vsyncpa [#allocation4], 1

</llo_original>
